<compile_context>
chip_gen: v7x
topology: tpu7x:2x2x1
jax: 0.10.0
libtpu: 0.0.40
codegen_flags: <defaults>
</compile_context>

<pallas_src>
import functools
import math

import numpy as np
import jax
import jax.numpy as jnp
from jax import lax
from jax.experimental import pallas as pl
from jax.experimental.pallas import tpu as pltpu


# ----------------------------- Pallas kernels ------------------------------

def _ttm_dense_kernel(x_ref, w_ref, o_ref, *, thres, apply_act):
    # y = x @ W^T with W given as (out_channel, in_channel); dot_general
    # contracts W's last axis so no transposed copy is ever materialized.
    y = lax.dot_general(
        x_ref[...], w_ref[...],
        dimension_numbers=(((1,), (1,)), ((), ())),
        preferred_element_type=jnp.float32,
    )
    if apply_act:
        y = jnp.clip(y, 0.0, thres)      # ReLUN fused into the matmul kernel
    o_ref[...] = y.astype(o_ref.dtype)


def _ttm_dense_bias_kernel(x_ref, w_ref, b_ref, o_ref, *, thres, apply_act):
    y = lax.dot_general(
        x_ref[...], w_ref[...],
        dimension_numbers=(((1,), (1,)), ((), ())),
        preferred_element_type=jnp.float32,
    )
    y = y + b_ref[...]                   # bias-then-clip, like the module
    if apply_act:
        y = jnp.clip(y, 0.0, thres)
    o_ref[...] = y.astype(o_ref.dtype)


# ----------------------------- Pallas wrapper -------------------------------

def fused_linear_relun(x, w_oi, bias=None, act_thres=6.0, activation=True,
                       block_rows=512):
    """Single fused kernel: y = clip(x @ w_oi^T + bias, 0, act_thres).

    x     : (..., in_channel)
    w_oi  : (out_channel, in_channel)   -- dense TTM weight
    bias  : (out_channel,) or None
    """
    x_shape = x.shape
    out_channel, in_channel = w_oi.shape
    assert x_shape[-1] == in_channel
    x2d = x.reshape((-1, in_channel))
    n = x2d.shape[0]

    # Batch tile: full slab if small, else a multiple-of-8 row tile so Pallas
    # software-pipelines HBM<->VMEM behind the MXU (last partial block masked).
    tb = max(8, (block_rows // 8) * 8)
    if n <= tb:
        tb = n
        grid = (1,)
    else:
        grid = (pl.cdiv(n, tb),)

    in_specs = [
        pl.BlockSpec((tb, in_channel), lambda i: (i, 0)),
        pl.BlockSpec((out_channel, in_channel), lambda i: (0, 0)),
    ]
    args = [x2d, w_oi]
    if bias is not None:
        in_specs.append(pl.BlockSpec((1, out_channel), lambda i: (0, 0)))
        args.append(bias.reshape(1, out_channel).astype(x2d.dtype))
        kern = functools.partial(_ttm_dense_bias_kernel,
                                 thres=float(act_thres),
                                 apply_act=bool(activation))
    else:
        kern = functools.partial(_ttm_dense_kernel,
                                 thres=float(act_thres),
                                 apply_act=bool(activation))

    # NOTE: out_channel (=16 here) is below 128 lanes, so output stores are
    # masked; keeping the module's (batch, out_channel) layout is chosen over
    # a transposed lane-dense store + extra transpose-back pass.
    out = pl.pallas_call(
        kern,
        out_shape=jax.ShapeDtypeStruct((n, out_channel), x.dtype),
        grid=grid,
        in_specs=in_specs,
        out_specs=pl.BlockSpec((tb, out_channel), lambda i: (i, 0)),
        compiler_params=pltpu.CompilerParams(
            dimension_semantics=("parallel",)),   # megacore-shard batch (v7x)
    )(*args)
    return out.reshape(x_shape[:-1] + (out_channel,))


# ----------------------- TT-core pre-contraction ----------------------------

def precontract_tt_cores(tt_core_weights, in_shape, out_shape, tt_rank):
    """Contract the TT cores into the dense (out_channel, in_channel) matrix.

    Mathematically identical to the module's sequential per-core forward
    (linear-map associativity); done once per layer since weights are static.
    Core i is stored as (tt_rank[i]*out_shape[i], in_shape[i]*tt_rank[i+1]),
    i.e. MZIBlockLinear.get_2d_weight() layout.
    """
    order = len(in_shape)
    assert tt_rank[0] == 1 and tt_rank[-1] == 1, "boundary TT ranks must be 1"
    acc = tt_core_weights[0].reshape(
        tt_rank[0], out_shape[0], in_shape[0], tt_rank[1])
    o_dim, i_dim = out_shape[0], in_shape[0]
    for k in range(1, order):
        gk = tt_core_weights[k].reshape(
            tt_rank[k], out_shape[k], in_shape[k], tt_rank[k + 1])
        acc = jnp.tensordot(acc, gk, axes=[[3], [0]])   # (1,O,I,o_k,n_k,r_{k+1})
        acc = jnp.transpose(acc, (0, 1, 3, 2, 4, 5))    # (1,O,o_k,I,n_k,r_{k+1})
        o_dim *= out_shape[k]
        i_dim *= in_shape[k]
        acc = acc.reshape(tt_rank[0], o_dim, i_dim, tt_rank[k + 1])
    return acc.reshape(o_dim, i_dim)                    # (out_channel, in_channel)


# ------------------------- TTM_LinearBlock forward --------------------------

def ttm_linear_block_forward(x, tt_core_weights, in_shape, out_shape, tt_rank,
                             bias=None, act_thres=6.0, activation=True,
                             block_rows=512):
    """y = ReLUN(x @ W_ttm^T + bias) with one fused Pallas kernel.

    # TODO(synk): for very large TT configurations where the dense
    # (out_channel, in_channel) weight would not fit, a per-core contraction
    # chain fused in VMEM would be needed instead of pre-contraction.
    """
    w_oi = precontract_tt_cores(tt_core_weights, in_shape, out_shape, tt_rank)
    return fused_linear_relun(x, w_oi, bias=bias, act_thres=act_thres,
                              activation=activation, block_rows=block_rows)


# ------------------------- deterministic parameters -------------------------

def init_tt_cores(key, in_channel, in_shape, out_shape, tt_rank):
    """Deterministic synthetic init mirroring reset_tt_cores() scaling.

    # TODO(synk): MZIBlockLinear's internal MZI phase/USV parametrization and
    # quantization (w_bit, in_bit, photodetect) has no clean Pallas
    # equivalent; cores are materialized directly as their 2D weights
    # (equivalent to mode='weight' after sync_parameters()).
    """
    std = math.sqrt(5) / math.sqrt(in_channel)
    r = float(np.prod(tt_rank))
    d = len(in_shape)
    std_factors = (std / r) ** (1.0 / d)
    weights = []
    for i in range(d):
        out_i = tt_rank[i] * out_shape[i]
        in_i = in_shape[i] * tt_rank[i + 1]
        key, sub = jax.random.split(key)
        w = std_factors * jax.random.normal(sub, (out_i, in_i), dtype=jnp.float32)
        weights.append(w)
    return weights


# ----------------------------------- main -----------------------------------

if __name__ == "__main__":
    # Module defaults: in_shape=out_shape=[2,2,2,2] -> in_channel=out_channel=16,
    # tt_rank=[1,4,4,4,1], bias=False, activation=True (ReLUN with act_thres=6).
    in_shape = [2, 2, 2, 2]
    out_shape = [2, 2, 2, 2]
    tt_rank = [1, 4, 4, 4, 1]
    in_channel = int(np.prod(in_shape))
    out_channel = int(np.prod(out_shape))
    act_thres = 6.0

    key = jax.random.PRNGKey(0)
    kx, kw, kx2, kb = jax.random.split(key, 4)

    cores = init_tt_cores(kw, in_channel, in_shape, out_shape, tt_rank)

    # -------- float64 reference weight (independent full-matrix einsum) ------
    Gs = [
        np.asarray(w, np.float64).reshape(
            tt_rank[i], out_shape[i], in_shape[i], tt_rank[i + 1])
        for i, w in enumerate(cores)
    ]
    W_full = np.einsum("abcd,defg,ghij,jklm->behkcfil", *Gs).reshape(
        out_channel, in_channel)

    rtol, atol = 2e-2, 1e-2

    # ---- test 1: module defaults (batch=2, no bias, ReLUN) ------------------
    batch = 2
    x = jax.random.normal(kx, (batch, in_channel), dtype=jnp.float32)
    out = ttm_linear_block_forward(
        x, cores, in_shape, out_shape, tt_rank,
        bias=None, act_thres=act_thres, activation=True)
    out = jax.block_until_ready(out)

    ref = np.clip(np.asarray(x, np.float64) @ W_full.T, 0.0, act_thres)
    assert out.shape == (batch, out_channel), out.shape
    assert np.allclose(np.asarray(out, np.float64), ref, rtol=rtol, atol=atol), (
        "mismatch vs reference (batch=2)")

    # ---- test 2: larger batch exercising the tiled/pipelined grid + bias ----
    batch2 = 2048                       # block_rows=512 -> 4 grid steps
    x2 = jax.random.normal(kx2, (batch2, in_channel), dtype=jnp.float32)
    bound = 1.0 / math.sqrt(in_channel)
    bias = jax.random.uniform(kb, (out_channel,), dtype=jnp.float32,
                              minval=-bound, maxval=bound)
    out2 = ttm_linear_block_forward(
        x2, cores, in_shape, out_shape, tt_rank,
        bias=bias, act_thres=act_thres, activation=True, block_rows=512)
    out2 = jax.block_until_ready(out2)

    ref2 = np.clip(
        np.asarray(x2, np.float64) @ W_full.T + np.asarray(bias, np.float64),
        0.0, act_thres)
    assert out2.shape == (batch2, out_channel), out2.shape
    assert np.allclose(np.asarray(out2, np.float64), ref2, rtol=rtol, atol=atol), (
        "mismatch vs reference (batch=2048, bias)")

    print("KERNEL_OK")
</pallas_src>

<mosaic_0001>
module attributes {stable_mosaic.version = 11 : i64} {
  func.func @_ttm_dense_kernel(%arg0: i32, %arg1: memref<2x16xf32, #tpu.memory_space<vmem>>, %arg2: memref<16x16xf32, #tpu.memory_space<vmem>>, %arg3: memref<2x16xf32, #tpu.memory_space<vmem>>) attributes {dimension_semantics = [#tpu.dimension_semantics<parallel>], iteration_bounds = array<i64: 1>, scalar_prefetch = 0 : i64, scratch_operands = 0 : i64, tpu.core_type = #tpu.core_type<tc>, window_params = [{transform_indices = @transform_0, window_bounds = array<i64: 2, 16>}, {pipeline_mode = #tpu.pipeline_mode<synchronous>, transform_indices = @transform_1, window_bounds = array<i64: 16, 16>}, {transform_indices = @transform_2, window_bounds = array<i64: 2, 16>}]} {
    %c0 = arith.constant 0 : index
    %c0_0 = arith.constant 0 : index
    %0 = vector.load %arg1[%c0, %c0_0] : memref<2x16xf32, #tpu.memory_space<vmem>>, vector<2x16xf32>
    %c0_1 = arith.constant 0 : index
    %c0_2 = arith.constant 0 : index
    %1 = vector.load %arg2[%c0_1, %c0_2] : memref<16x16xf32, #tpu.memory_space<vmem>>, vector<16x16xf32>
    %cst = arith.constant dense<0.000000e+00> : vector<2x16xf32>
    %2 = tpu.matmul %0, %1, %cst {dimension_numbers = #tpu.dot_dimension_numbers<[1], [1], [0], [0], [0, 0, 1, 0], [], []>} : vector<2x16xf32>, vector<16x16xf32>, vector<2x16xf32> -> vector<2x16xf32>
    %cst_3 = arith.constant 0.000000e+00 : f32
    %cst_4 = arith.constant 6.000000e+00 : f32
    %3 = vector.broadcast %cst_3 : f32 to vector<2x16xf32>
    %4 = arith.maximumf %3, %2 : vector<2x16xf32>
    %5 = vector.broadcast %cst_4 : f32 to vector<2x16xf32>
    %6 = arith.minimumf %5, %4 : vector<2x16xf32>
    %c0_5 = arith.constant 0 : index
    %c0_6 = arith.constant 0 : index
    %7 = vector.load %arg3[%c0_5, %c0_6] : memref<2x16xf32, #tpu.memory_space<vmem>>, vector<2x16xf32>
    tpu.vector_store %arg3[%c0_5, %c0_6], %6 {strides = array<i32>} : memref<2x16xf32, #tpu.memory_space<vmem>>, vector<2x16xf32>,
    return
  }
  func.func @transform_0(%arg0: i32) -> (i32, i32) {
    %c0_i32 = arith.constant 0 : i32
    %c0_i32_0 = arith.constant 0 : i32
    return %arg0, %c0_i32 : i32, i32
  }
  func.func @transform_1(%arg0: i32) -> (i32, i32) {
    %c0_i32 = arith.constant 0 : i32
    %c0_i32_0 = arith.constant 0 : i32
    %c0_i32_1 = arith.constant 0 : i32
    return %c0_i32, %c0_i32_0 : i32, i32
  }
  func.func @transform_2(%arg0: i32) -> (i32, i32) {
    %c0_i32 = arith.constant 0 : i32
    %c0_i32_0 = arith.constant 0 : i32
    return %arg0, %c0_i32 : i32, i32
  }
}

</mosaic_0001>

<llo_original>
// kernel: tpu_custom_call.1
$region0: #{tpu_custom_call.1}
  #allocation0 [shape = 'u32[]', space=smem, size = 0x4, offset = 0x4, fixed_abs, tag = 'smem constant byte address 0x4 - core index']
  #allocation1 [shape = 'u32[144,128]{1,0:T(1,128)}', space=vmem, size = 0x12000, scoped, tag = 'internal scratch']
  %s0 = inlined_call_operand.hbm [shape: f32[2,16], index: 0, kind: input, shape index: {}]
  %s1 = inlined_call_operand.hbm [shape: f32[16,16], index: 1, kind: input, shape index: {}]
  %s2 = inlined_call_operand.hbm [shape: f32[2,16], index: 2, kind: output, shape index: {}]
  %s3 = sld [smem:[#allocation0]]
  $region26: #{tpu_custom_call.1} parent=0
    _
  %s5 = ssub.s32 1, %s3
  %s6 = scalar_select 0, %s5, %s3
  $region1: #{tpu_custom_call.1} parent=0
    #allocation2 [shape = 'u8[1024]{0}', space=vmem, size = 0x400, scoped, tag = 'input window, operand 0, single buffered']
    #allocation3 [shape = 's32[1]{0}', space=sflag, size = 0x4, scoped, tag = 'scoped memory for tpu_custom_call.1']
    #allocation4 [shape = 's32[1]{0}', space=sflag, size = 0x4, scoped, tag = 'scoped memory for tpu_custom_call.1']
    #allocation5 [shape = 'u8[8192]{0}', space=vmem, size = 0x2000, scoped, tag = 'input window, operand 1, single buffered']
    #allocation6 [shape = 's32[1]{0}', space=sflag, size = 0x4, scoped, tag = 'scoped memory for tpu_custom_call.1']
    #allocation7 [shape = 'u8[1024]{0}', space=vmem, size = 0x400, scoped, tag = 'output window, operand 0, single buffered']
    %7 = vsyncpa [#allocation3], 0
    %8 = vsyncpa [#allocation6], 0
    %9 = vsyncpa [#allocation4], 0
    // Predicated region
    $region2: #{tpu_custom_call.1} parent=1 // pred_check
      _
    $region3: #{tpu_custom_call.1} parent=1 // pred_check_branch
      %11 = sbr.rel (0) target = $region5
    $region4: #{tpu_custom_call.1} parent=1 // pred_region
      %s13 = ssub.s32 32, 32
      %14 = vsyncadd [#allocation3], %s13
      %s16 = sshll.u32 [#allocation2], 4
      %s17 = int_to_ptr.vmem [resolvable:$true] %s16
      %19 = dma.hbm_to_vmem [thread:$0]  %s0, 32, %s17, [#allocation3]
    $region5: #{tpu_custom_call.1} parent=1 // pred_fallthru
      _
    // Predicated region
    $region6: #{tpu_custom_call.1} parent=1 // pred_check
      _
    $region7: #{tpu_custom_call.1} parent=1 // pred_check_branch
      %21 = sbr.rel (0) target = $region9
    $region8: #{tpu_custom_call.1} parent=1 // pred_region
      %s23 = ssub.s32 256, 256
      %24 = vsyncadd [#allocation6], %s23
      %s25 = sshll.u32 [#allocation5], 4
      %s26 = int_to_ptr.vmem [resolvable:$true] %s25
      %31 = dma.hbm_to_vmem [thread:$0]  %s1, 256, %s26, [#allocation6], 128, 128, 8
    $region9: #{tpu_custom_call.1} parent=1 // pred_fallthru
      _
    // Predicated region
    $region10: #{tpu_custom_call.1} parent=1 // pred_check
      _
    $region11: #{tpu_custom_call.1} parent=1 // pred_check_branch
      %33 = sbr.rel (0) target = $region13
    $region12: #{tpu_custom_call.1} parent=1 // pred_region
      %34 = dma.done [#allocation3], 32
    $region13: #{tpu_custom_call.1} parent=1 // pred_fallthru
      _
    // Predicated region
    $region14: #{tpu_custom_call.1} parent=1 // pred_check
      _
    $region15: #{tpu_custom_call.1} parent=1 // pred_check_branch
      %36 = sbr.rel (0) target = $region17
    $region16: #{tpu_custom_call.1} parent=1 // pred_region
      %37 = dma.done [#allocation6], 256
    $region17: #{tpu_custom_call.1} parent=1 // pred_fallthru
      _
    %v38 = vld [vmem:[#allocation2] sm:$0x3]
    %v39 = vld [vmem:[#allocation5] sm:$0xff]
    %v40 = vld [vmem:[#allocation5 + $0x8] sm:$0xff]
    %vm41 = vcmask 130048
    %v43 = vsel %vm41, %v38, 0
    %v46 = vsel %vm41, %v39, 0
    %v49 = vsel %vm41, %v40, 0
    %51 = vmatprep.subr.mxu0 0.0
    %52 = vmatpush1.xpose.msra.mxu0 %v46
    %53 = vmatprep.subr.mxu0 0.0
    %54 = vmatpush1.xpose.msra.mxu0 %v49
    %55 = vmatprep.subr.mxu0 0.0
    %56 = vmatpush1.xpose.msra.mxu0 0.0
    %57 = vmatprep.subr.mxu0 0.0
    %58 = vmatpush1.xpose.msra.mxu0 0.0
    %59 = vmatprep.subr.mxu0 0.0
    %60 = vmatpush1.xpose.msra.mxu0 0.0
    %61 = vmatprep.subr.mxu0 0.0
    %62 = vmatpush1.xpose.msra.mxu0 0.0
    %63 = vmatprep.subr.mxu0 0.0
    %64 = vmatpush1.xpose.msra.mxu0 0.0
    %65 = vmatprep.subr.mxu0 0.0
    %66 = vmatpush1.xpose.msra.mxu0 0.0
    %67 = vmatprep.subr.mxu0 0.0
    %68 = vmatpush1.xpose.msra.mxu0 0.0
    %69 = vmatprep.subr.mxu0 0.0
    %70 = vmatpush1.xpose.msra.mxu0 0.0
    %71 = vmatprep.subr.mxu0 0.0
    %72 = vmatpush1.xpose.msra.mxu0 0.0
    %73 = vmatprep.subr.mxu0 0.0
    %74 = vmatpush1.xpose.msra.mxu0 0.0
    %75 = vmatprep.subr.mxu0 0.0
    %76 = vmatpush1.xpose.msra.mxu0 0.0
    %77 = vmatprep.subr.mxu0 0.0
    %78 = vmatpush1.xpose.msra.mxu0 0.0
    %79 = vmatprep.subr.mxu0 0.0
    %80 = vmatpush1.xpose.msra.mxu0 0.0
    %81 = vmatprep.subr.mxu0 0.0
    %82 = vmatpush1.xpose.msra.mxu0 0.0
    %83 = vmatprep.subr.mxu0 0.0
    %84 = vmatpush1.xpose.msra.mxu0 0.0
    %85 = vmatprep.subr.mxu0 0.0
    %86 = vmatpush1.xpose.msra.mxu0 0.0
    %87 = vmatprep.subr.mxu0 0.0
    %88 = vmatpush1.xpose.msra.mxu0 0.0
    %89 = vmatprep.subr.mxu0 0.0
    %90 = vmatpush1.xpose.msra.mxu0 0.0
    %91 = vmatprep.subr.mxu0 0.0
    %92 = vmatpush1.xpose.msra.mxu0 0.0
    %93 = vmatprep.subr.mxu0 0.0
    %94 = vmatpush1.xpose.msra.mxu0 0.0
    %95 = vmatprep.subr.mxu0 0.0
    %96 = vmatpush1.xpose.msra.mxu0 0.0
    %97 = vmatprep.subr.mxu0 0.0
    %98 = vmatpush1.xpose.msra.mxu0 0.0
    %99 = vmatprep.subr.mxu0 0.0
    %100 = vmatpush1.xpose.msra.mxu0 0.0
    %101 = vmatprep.subr.mxu0 0.0
    %102 = vmatpush1.xpose.msra.mxu0 0.0
    %103 = vmatprep.subr.mxu0 0.0
    %104 = vmatpush1.xpose.msra.mxu0 0.0
    %105 = vmatprep.subr.mxu0 0.0
    %106 = vmatpush1.xpose.msra.mxu0 0.0
    %107 = vmatprep.subr.mxu0 0.0
    %108 = vmatpush1.xpose.msra.mxu0 0.0
    %109 = vmatprep.subr.mxu0 0.0
    %110 = vmatpush1.xpose.msra.mxu0 0.0
    %111 = vmatprep.subr.mxu0 0.0
    %112 = vmatpush1.xpose.msra.mxu0 0.0
    %113 = vmatprep.subr.mxu0 0.0
    %114 = vmatpush1.xpose.msra.mxu0 0.0
    %115 = vmatprep.mubr.f32.mxu0 0.0
    %116 = vmatmul.mubr.f32.gmra.mrb[0].mxu0 %v43
    %v117 = vpop.f32.mrb[0].mxu0
    %v118 = vadd.f32 0.0, %v117
    %v119 = vpop.f32.mrb[0].mxu0
    %120 = vdwg.mxu0
    %v121 = vmax.f32 %v118, 0.0
    %v122 = vmin.f32 %v121, 6.0
    %vm123 = vcmask 123904
    %124 = vst.msk [vmem:[#allocation7] sm:$0x3] %vm123, %v122
    // Predicated region
    $region18: #{tpu_custom_call.1} parent=1 // pred_check
      _
    $region19: #{tpu_custom_call.1} parent=1 // pred_check_branch
      %126 = sbr.rel (0) target = $region21
    $region20: #{tpu_custom_call.1} parent=1 // pred_region
      %s128 = ssub.s32 32, 32
      %129 = vsyncadd [#allocation4], %s128
      %s131 = sshll.u32 [#allocation7], 4
      %s132 = int_to_ptr.vmem [resolvable:$true] %s131
      %134 = dma.vmem_to_hbm [thread:$0]  %s132, 32, %s2, [#allocation4]
    $region21: #{tpu_custom_call.1} parent=1 // pred_fallthru
      _
    // Predicated region
    $region22: #{tpu_custom_call.1} parent=1 // pred_check
      _
    $region23: #{tpu_custom_call.1} parent=1 // pred_check_branch
      %136 = sbr.rel (0) target = $region25
    $region24: #{tpu_custom_call.1} parent=1 // pred_region
      %137 = dma.done [#allocation4], 32
    $region25: #{tpu_custom_call.1} parent=1 // pred_fallthru
      _
    %138 = vsyncpa [#allocation3], 1
    %139 = vsyncpa [#allocation6], 1
    %140 = vsyncpa [#allocation4], 1

</llo_original>
